<compile_context>
chip_gen: v6e
topology: v6e:2x2x1
jax: 0.10.0
libtpu: 0.0.40
codegen_flags: <defaults>
</compile_context>

<pallas_src>
import jax
import jax.numpy as jnp
from jax import lax
from jax.experimental import pallas as pl
from jax.experimental.pallas import tpu as pltpu

BERT_SIZE = 768          # bert_size in the module
N_FC1 = 4                # fc1   : 768 -> 4
N_COLOUR = 7             # colour: 768 -> 7
N_O = 7                  # o     : 768 -> 7
N_TOTAL = N_FC1 + N_COLOUR + N_O   # 18 real output lanes
N_PAD = 128              # lane-dense padded output width (keep at 128)
MAX_TILE_B = 1024        # double-buffered f32 input ~6 MiB -> fits v5e/v6e/v7x


def _heads_kernel(x_ref, w_ref, b_ref, out_ref):
    """One fused bf16 MXU pass + three segmented row-wise softmaxes (f32)."""
    # In-kernel cast to bf16 (input DMA stays f32; cast is hidden under HBM).
    x = x_ref[...].astype(jnp.bfloat16)              # [TB, 768]
    w = w_ref[...]                                   # [768, 128] bf16, resident
    logits = jnp.dot(x, w, preferred_element_type=jnp.float32)
    logits = logits + b_ref[...]                     # [1, 128] f32 broadcast

    # Per-lane head id: lanes 0:4 -> fc1, 4:11 -> colour, 11:18 -> o, rest pad.
    lane = lax.broadcasted_iota(jnp.int32, logits.shape, 1)
    seg0 = lane < N_FC1
    seg1 = (lane >= N_FC1) & (lane < N_FC1 + N_COLOUR)
    seg2 = (lane >= N_FC1 + N_COLOUR) & (lane < N_TOTAL)
    valid = lane < N_TOTAL

    neg = jnp.float32(-1e30)
    # Single masked max over the 18 valid lanes (one XLU reduce, shared shift).
    m = jnp.max(jnp.where(valid, logits, neg), axis=1, keepdims=True)
    # Pad lanes get exp(-1e30) == 0, so they contribute nothing anywhere.
    e = jnp.exp(jnp.where(valid, logits - m, neg))

    # Per-head denominators ([TB, 1] each), inverted on the EUP (3 recips/row).
    s0 = jnp.sum(jnp.where(seg0, e, 0.0), axis=1, keepdims=True)
    s1 = jnp.sum(jnp.where(seg1, e, 0.0), axis=1, keepdims=True)
    s2 = jnp.sum(jnp.where(seg2, e, 0.0), axis=1, keepdims=True)
    inv0 = pl.reciprocal(s0, approx=True)
    inv1 = pl.reciprocal(s1, approx=True)
    inv2 = pl.reciprocal(s2, approx=True)
    inv = jnp.where(seg0, inv0, jnp.where(seg1, inv1, inv2))

    # Pad lanes are exactly 0 (e == 0 there). bf16 writeback halves HBM bytes.
    out_ref[...] = (e * inv).astype(out_ref.dtype)


def fuse_head_params(w1, b1, wc, bc, wo, bo):
    """One-time prep (run OUTSIDE the per-call path): fuse + pad the 3 heads."""
    w_cat = jnp.concatenate([w1, wc, wo], axis=1)                    # [768, 18]
    w_pad = jnp.pad(w_cat, ((0, 0), (0, N_PAD - N_TOTAL)))           # [768, 128]
    b_cat = jnp.concatenate([b1, bc, bo], axis=1)                    # [1, 18]
    b_pad = jnp.pad(b_cat, ((0, 0), (0, N_PAD - N_TOTAL)))           # [1, 128]
    return w_pad.astype(jnp.bfloat16), b_pad.astype(jnp.float32)


def _choose_tile_b(B):
    """>= 2 grid steps when possible (v7x megacore), sublane-aligned, capped."""
    if B <= 8:
        return B                       # full-array block (allowed for small B)
    half = (B + 1) // 2                # cdiv(B, 2) -> at least 2 grid steps
    half = ((half + 7) // 8) * 8       # round up to sublane multiple
    return min(MAX_TILE_B, half)


@jax.jit
def bert_train_heads(pooled, w_pad, b_pad):
    """pooled [B,768] f32, fused params -> (X:[B,4], Y:[B,7], Z:[B,7]) f32."""
    B = pooled.shape[0]
    tile_b = _choose_tile_b(B)
    grid = (pl.cdiv(B, tile_b),)

    out = pl.pallas_call(
        _heads_kernel,
        out_shape=jax.ShapeDtypeStruct((B, N_PAD), jnp.bfloat16),
        grid_spec=pltpu.PrefetchScalarGridSpec(
            num_scalar_prefetch=0,
            grid=grid,
            in_specs=[
                pl.BlockSpec((tile_b, BERT_SIZE), lambda i: (i, 0)),   # pooled tile (f32)
                pl.BlockSpec((BERT_SIZE, N_PAD), lambda i: (0, 0)),    # fused W (resident)
                pl.BlockSpec((1, N_PAD), lambda i: (0, 0)),            # fused b (resident)
            ],
            out_specs=pl.BlockSpec((tile_b, N_PAD), lambda i: (i, 0)),
        ),
        compiler_params=pltpu.CompilerParams(
            dimension_semantics=("parallel",),   # shard batch tiles across TCs (v7x)
        ),
    )(pooled, w_pad, b_pad)

    X = out[:, :N_FC1].astype(jnp.float32)
    Y = out[:, N_FC1:N_FC1 + N_COLOUR].astype(jnp.float32)
    Z = out[:, N_FC1 + N_COLOUR:N_TOTAL].astype(jnp.float32)
    return X, Y, Z


def _init_linear(key, fan_in, fan_out):
    """Deterministic nn.Linear-style init: U(-1/sqrt(fan_in), 1/sqrt(fan_in))."""
    kw, kb = jax.random.split(key)
    bound = 1.0 / jnp.sqrt(jnp.float32(fan_in))
    w = jax.random.uniform(kw, (fan_in, fan_out), jnp.float32, -bound, bound)
    b = jax.random.uniform(kb, (1, fan_out), jnp.float32, -bound, bound)
    return w, b


def _reference(pooled, w1, b1, wc, bc, wo, bo):
    def head(w, b):
        return jax.nn.softmax(pooled @ w + b, axis=1)
    return head(w1, b1), head(wc, bc), head(wo, bo)


if __name__ == "__main__":
    key = jax.random.PRNGKey(0)
    k_in, k1, k2, k3 = jax.random.split(key, 4)

    B = 2  # small batch
    # Simulated BERT pooler output (pooler ends in tanh, so values in (-1, 1)).
    pooled = jnp.tanh(jax.random.normal(k_in, (B, BERT_SIZE), jnp.float32))

    w1, b1 = _init_linear(k1, BERT_SIZE, N_FC1)      # fc1:    768 -> 4
    wc, bc = _init_linear(k2, BERT_SIZE, N_COLOUR)   # colour: 768 -> 7
    wo, bo = _init_linear(k3, BERT_SIZE, N_O)        # o:      768 -> 7

    # One-time fusion of the three heads (hoisted out of the per-call path).
    w_pad, b_pad = fuse_head_params(w1, b1, wc, bc, wo, bo)
    jax.block_until_ready((w_pad, b_pad))

    X, Y, Z = bert_train_heads(pooled, w_pad, b_pad)
    jax.block_until_ready((X, Y, Z))

    Xr, Yr, Zr = _reference(pooled, w1, b1, wc, bc, wo, bo)
    assert X.shape == (B, N_FC1) and Y.shape == (B, N_COLOUR) and Z.shape == (B, N_O)
    # bf16 matmul + bf16 output + approx reciprocal -> relaxed tolerance vs the
    # f32 reference (probabilities agree to ~1e-3).
    assert jnp.allclose(X, Xr, atol=2e-2, rtol=2e-2)
    assert jnp.allclose(Y, Yr, atol=2e-2, rtol=2e-2)
    assert jnp.allclose(Z, Zr, atol=2e-2, rtol=2e-2)
    # Each softmax row sums to ~1 (approx reciprocal + bf16 output -> ~1e-3).
    assert jnp.allclose(jnp.sum(X, axis=1), 1.0, atol=1e-2)
    assert jnp.allclose(jnp.sum(Y, axis=1), 1.0, atol=1e-2)
    assert jnp.allclose(jnp.sum(Z, axis=1), 1.0, atol=1e-2)

    print("KERNEL_OK")
</pallas_src>

<mosaic_0001>
module attributes {stable_mosaic.version = 11 : i64} {
  func.func @_heads_kernel(%arg0: i32, %arg1: memref<2x768xf32, #tpu.memory_space<vmem>>, %arg2: memref<768x128xbf16, #tpu.memory_space<vmem>>, %arg3: memref<1x128xf32, #tpu.memory_space<vmem>>, %arg4: memref<2x128xbf16, #tpu.memory_space<vmem>>) attributes {dimension_semantics = [#tpu.dimension_semantics<parallel>], iteration_bounds = array<i64: 1>, scalar_prefetch = 0 : i64, scratch_operands = 0 : i64, tpu.core_type = #tpu.core_type<tc>, window_params = [{transform_indices = @transform_0, window_bounds = array<i64: 2, 768>}, {pipeline_mode = #tpu.pipeline_mode<synchronous>, transform_indices = @transform_1, window_bounds = array<i64: 768, 128>}, {pipeline_mode = #tpu.pipeline_mode<synchronous>, transform_indices = @transform_2, window_bounds = array<i64: 1, 128>}, {transform_indices = @transform_3, window_bounds = array<i64: 2, 128>}]} {
    %c0 = arith.constant 0 : index
    %c0_0 = arith.constant 0 : index
    %0 = vector.load %arg1[%c0, %c0_0] : memref<2x768xf32, #tpu.memory_space<vmem>>, vector<2x768xf32>
    %1 = arith.truncf %0 : vector<2x768xf32> to vector<2x768xbf16>
    %c0_1 = arith.constant 0 : index
    %c0_2 = arith.constant 0 : index
    %2 = vector.load %arg2[%c0_1, %c0_2] : memref<768x128xbf16, #tpu.memory_space<vmem>>, vector<768x128xbf16>
    %cst = arith.constant dense<0.000000e+00> : vector<2x128xf32>
    %3 = tpu.matmul %1, %2, %cst {dimension_numbers = #tpu.dot_dimension_numbers<[1], [0], [0], [1], [0, 0, 1, 1], [], []>} : vector<2x768xbf16>, vector<768x128xbf16>, vector<2x128xf32> -> vector<2x128xf32>
    %c0_3 = arith.constant 0 : index
    %c0_4 = arith.constant 0 : index
    %4 = vector.load %arg3[%c0_3, %c0_4] : memref<1x128xf32, #tpu.memory_space<vmem>>, vector<1x128xf32>
    %5 = vector.broadcast %4 : vector<1x128xf32> to vector<2x128xf32>
    %6 = arith.addf %3, %5 : vector<2x128xf32>
    %7 = tpu.iota {dimensions = array<i32: 1>} : vector<2x128xi32>
    %c4_i32 = arith.constant 4 : i32
    %8 = vector.broadcast %c4_i32 : i32 to vector<2x128xi32>
    %9 = arith.cmpi slt, %7, %8 : vector<2x128xi32>
    %c4_i32_5 = arith.constant 4 : i32
    %10 = vector.broadcast %c4_i32_5 : i32 to vector<2x128xi32>
    %11 = arith.cmpi sge, %7, %10 : vector<2x128xi32>
    %c11_i32 = arith.constant 11 : i32
    %12 = vector.broadcast %c11_i32 : i32 to vector<2x128xi32>
    %13 = arith.cmpi slt, %7, %12 : vector<2x128xi32>
    %14 = arith.andi %11, %13 : vector<2x128xi1>
    %c11_i32_6 = arith.constant 11 : i32
    %15 = vector.broadcast %c11_i32_6 : i32 to vector<2x128xi32>
    %16 = arith.cmpi sge, %7, %15 : vector<2x128xi32>
    %c18_i32 = arith.constant 18 : i32
    %17 = vector.broadcast %c18_i32 : i32 to vector<2x128xi32>
    %18 = arith.cmpi slt, %7, %17 : vector<2x128xi32>
    %19 = arith.andi %16, %18 : vector<2x128xi1>
    %c18_i32_7 = arith.constant 18 : i32
    %20 = vector.broadcast %c18_i32_7 : i32 to vector<2x128xi32>
    %21 = arith.cmpi slt, %7, %20 : vector<2x128xi32>
    %cst_8 = arith.constant -1.000000e+30 : f32
    %22 = vector.broadcast %cst_8 : f32 to vector<2x128xf32>
    %23 = arith.select %21, %6, %22 : vector<2x128xi1>, vector<2x128xf32>
    %cst_9 = arith.constant dense<0xFF800000> : vector<2xf32>
    %24 = vector.multi_reduction <maximumf>, %23, %cst_9 [1] : vector<2x128xf32> to vector<2xf32>
    %25 = vector.shape_cast %24 : vector<2xf32> to vector<2x1xf32>
    %26 = vector.broadcast %25 : vector<2x1xf32> to vector<2x128xf32>
    %27 = arith.subf %6, %26 : vector<2x128xf32>
    %cst_10 = arith.constant -1.000000e+30 : f32
    %28 = vector.broadcast %cst_10 : f32 to vector<2x128xf32>
    %29 = arith.select %21, %27, %28 : vector<2x128xi1>, vector<2x128xf32>
    %30 = math.exp %29 : vector<2x128xf32>
    %cst_11 = arith.constant 0.000000e+00 : f32
    %31 = vector.broadcast %cst_11 : f32 to vector<2x128xf32>
    %32 = arith.select %9, %30, %31 : vector<2x128xi1>, vector<2x128xf32>
    %cst_12 = arith.constant dense<0.000000e+00> : vector<2xf32>
    %33 = vector.multi_reduction <add>, %32, %cst_12 [1] : vector<2x128xf32> to vector<2xf32>
    %34 = vector.shape_cast %33 : vector<2xf32> to vector<2x1xf32>
    %cst_13 = arith.constant 0.000000e+00 : f32
    %35 = vector.broadcast %cst_13 : f32 to vector<2x128xf32>
    %36 = arith.select %14, %30, %35 : vector<2x128xi1>, vector<2x128xf32>
    %cst_14 = arith.constant dense<0.000000e+00> : vector<2xf32>
    %37 = vector.multi_reduction <add>, %36, %cst_14 [1] : vector<2x128xf32> to vector<2xf32>
    %38 = vector.shape_cast %37 : vector<2xf32> to vector<2x1xf32>
    %cst_15 = arith.constant 0.000000e+00 : f32
    %39 = vector.broadcast %cst_15 : f32 to vector<2x128xf32>
    %40 = arith.select %19, %30, %39 : vector<2x128xi1>, vector<2x128xf32>
    %cst_16 = arith.constant dense<0.000000e+00> : vector<2xf32>
    %41 = vector.multi_reduction <add>, %40, %cst_16 [1] : vector<2x128xf32> to vector<2xf32>
    %42 = vector.shape_cast %41 : vector<2xf32> to vector<2x1xf32>
    %43 = tpu.reciprocal %34 {approx = true} : vector<2x1xf32> -> vector<2x1xf32>
    %44 = tpu.reciprocal %38 {approx = true} : vector<2x1xf32> -> vector<2x1xf32>
    %45 = tpu.reciprocal %42 {approx = true} : vector<2x1xf32> -> vector<2x1xf32>
    %46 = vector.shape_cast %44 : vector<2x1xf32> to vector<2x1xf32>
    %47 = vector.broadcast %46 : vector<2x1xf32> to vector<2x128xf32>
    %48 = vector.shape_cast %45 : vector<2x1xf32> to vector<2x1xf32>
    %49 = vector.broadcast %48 : vector<2x1xf32> to vector<2x128xf32>
    %50 = arith.select %14, %47, %49 : vector<2x128xi1>, vector<2x128xf32>
    %51 = vector.shape_cast %43 : vector<2x1xf32> to vector<2x1xf32>
    %52 = vector.broadcast %51 : vector<2x1xf32> to vector<2x128xf32>
    %53 = arith.select %9, %52, %50 : vector<2x128xi1>, vector<2x128xf32>
    %54 = arith.mulf %30, %53 : vector<2x128xf32>
    %55 = arith.truncf %54 : vector<2x128xf32> to vector<2x128xbf16>
    %c0_17 = arith.constant 0 : index
    %c0_18 = arith.constant 0 : index
    %56 = vector.load %arg4[%c0_17, %c0_18] : memref<2x128xbf16, #tpu.memory_space<vmem>>, vector<2x128xbf16>
    tpu.vector_store %arg4[%c0_17, %c0_18], %55 {strides = array<i32>} : memref<2x128xbf16, #tpu.memory_space<vmem>>, vector<2x128xbf16>,
    return
  }
  func.func @transform_0(%arg0: i32) -> (i32, i32) {
    %c0_i32 = arith.constant 0 : i32
    %c0_i32_0 = arith.constant 0 : i32
    return %arg0, %c0_i32 : i32, i32
  }
  func.func @transform_1(%arg0: i32) -> (i32, i32) {
    %c0_i32 = arith.constant 0 : i32
    %c0_i32_0 = arith.constant 0 : i32
    %c0_i32_1 = arith.constant 0 : i32
    return %c0_i32, %c0_i32_0 : i32, i32
  }
  func.func @transform_2(%arg0: i32) -> (i32, i32) {
    %c0_i32 = arith.constant 0 : i32
    %c0_i32_0 = arith.constant 0 : i32
    %c0_i32_1 = arith.constant 0 : i32
    return %c0_i32, %c0_i32_0 : i32, i32
  }
  func.func @transform_3(%arg0: i32) -> (i32, i32) {
    %c0_i32 = arith.constant 0 : i32
    %c0_i32_0 = arith.constant 0 : i32
    return %arg0, %c0_i32 : i32, i32
  }
}

</mosaic_0001>

<llo_original>
// kernel: bert_train_heads.1
$region0: #{bert_train_heads.1}
  #allocation0 [shape = 'u32[]', space=smem, size = 0x4, offset = 0x4, fixed_abs, tag = 'smem constant byte address 0x4 - core index']
  #allocation1 [shape = 'u32[144,128]{1,0:T(1,128)}', space=vmem, size = 0x12000, scoped, tag = 'internal scratch']
  %s0 = inlined_call_operand.hbm [shape: f32[2,768], index: 0, kind: input, shape index: {}]
  %s1 = inlined_call_operand.hbm [shape: bf16[768,128], index: 1, kind: input, shape index: {}]
  %s2 = inlined_call_operand.vmem [shape: f32[1,128], index: 2, kind: input, shape index: {}]
  %s3 = inlined_call_operand.vmem [shape: bf16[2,128], index: 3, kind: output, shape index: {}]
  %s4 = sld [smem:[#allocation0]]
  $region30: #{bert_train_heads.1} parent=0
    _
  %s6 = ssub.s32 1, %s4
  %s7 = scalar_select 0, %s6, %s4
  $region1: #{bert_train_heads.1} parent=0
    #allocation2 [shape = 'u8[6144]{0}', space=vmem, size = 0x1800, scoped, tag = 'input window, operand 0, single buffered']
    #allocation3 [shape = 's32[1]{0}', space=sflag, size = 0x4, scoped, tag = 'scoped memory for bert_train_heads.1']
    #allocation4 [shape = 'u8[196608]{0}', space=vmem, size = 0x30000, scoped, tag = 'input window, operand 1, single buffered']
    #allocation5 [shape = 's32[1]{0}', space=sflag, size = 0x4, scoped, tag = 'scoped memory for bert_train_heads.1']
    %8 = vsyncpa [#allocation3], 0
    %9 = vsyncpa [#allocation5], 0
    // Predicated region
    $region2: #{bert_train_heads.1} parent=1 // pred_check
      _
    $region3: #{bert_train_heads.1} parent=1 // pred_check_branch
      %11 = sbr.rel (0) target = $region5
    $region4: #{bert_train_heads.1} parent=1 // pred_region
      %s13 = ssub.s32 192, 192
      %14 = vsyncadd [#allocation3], %s13
      %s16 = sshll.u32 [#allocation2], 4
      %s17 = int_to_ptr.vmem [resolvable:$true] %s16
      %19 = dma.hbm_to_vmem [thread:$0]  %s0, 192, %s17, [#allocation3]
    $region5: #{bert_train_heads.1} parent=1 // pred_fallthru
      _
    // Predicated region
    $region6: #{bert_train_heads.1} parent=1 // pred_check
      _
    $region7: #{bert_train_heads.1} parent=1 // pred_check_branch
      %21 = sbr.rel (0) target = $region9
    $region8: #{bert_train_heads.1} parent=1 // pred_region
      %s23 = ssub.s32 6144, 6144
      %24 = vsyncadd [#allocation5], %s23
      %s25 = sshll.u32 [#allocation4], 4
      %s26 = int_to_ptr.vmem [resolvable:$true] %s25
      %31 = dma.hbm_to_vmem [thread:$0]  %s1, 6144, %s26, [#allocation5], 64, 64, 4
    $region9: #{bert_train_heads.1} parent=1 // pred_fallthru
      _
    // Predicated region
    $region10: #{bert_train_heads.1} parent=1 // pred_check
      _
    $region11: #{bert_train_heads.1} parent=1 // pred_check_branch
      %33 = sbr.rel (0) target = $region13
    $region12: #{bert_train_heads.1} parent=1 // pred_region
      _
    $region13: #{bert_train_heads.1} parent=1 // pred_fallthru
      _
    // Predicated region
    $region14: #{bert_train_heads.1} parent=1 // pred_check
      _
    $region15: #{bert_train_heads.1} parent=1 // pred_check_branch
      %35 = sbr.rel (0) target = $region17
    $region16: #{bert_train_heads.1} parent=1 // pred_region
      %36 = dma.done [#allocation3], 192
    $region17: #{bert_train_heads.1} parent=1 // pred_fallthru
      _
    // Predicated region
    $region18: #{bert_train_heads.1} parent=1 // pred_check
      _
    $region19: #{bert_train_heads.1} parent=1 // pred_check_branch
      %38 = sbr.rel (0) target = $region21
    $region20: #{bert_train_heads.1} parent=1 // pred_region
      %39 = dma.done [#allocation5], 6144
    $region21: #{bert_train_heads.1} parent=1 // pred_fallthru
      _
    %v41 = vld [vmem:[#allocation2] sm:$0xff]
    %v42 = vld [vmem:[#allocation2 + $0x8] sm:$0xf]
    %v45 = vcombine.high %v41, %v41
    %v47 = vunpack.c.l.s4 1983009808
    %v48 = vunpack.c.0.s8 %v47
    %v49 = vlaneseq
    %v50 = vshrl.u32 %v49, 7
    %v51 = vsub.s32 %v48, %v50
    %v52 = vrot.slane %v41, %v51
    %v54 = vunpack.c.l.s4 1983009808
    %v55 = vunpack.c.0.s8 %v54
    %v56 = vlaneseq
    %v57 = vshrl.u32 %v56, 7
    %v58 = vsub.s32 %v55, %v57
    %v59 = vrot.slane %v45, %v58
    %v60 = vcombine.high %v52, %v52
    %v61 = vcombine.high %v59, %v59
    %v63 = vunpack.c.l.s4 1983009808
    %v64 = vunpack.c.0.s8 %v63
    %v65 = vlaneseq
    %v66 = vshrl.u32 %v65, 7
    %v67 = vsub.s32 %v64, %v66
    %v68 = vrot.slane %v42, %v67
    %v69 = vcombine.high %v68, %v68
    %v76 = vpack.c.bf16 %v52, %v52
    %v77 = vpack.c.bf16 %v60, %v60
    %v78 = vpack.c.bf16 %v59, %v59
    %v79 = vpack.c.bf16 %v61, %v61
    %v80 = vpack.c.bf16 %v68, %v68
    %v81 = vpack.c.bf16 %v69, %v69
    %v82 = vld [vmem:[#allocation4] sm:$0xf]
    %v83 = vld [vmem:[#allocation4 + $0x4] sm:$0xf]
    %v84 = vld [vmem:[#allocation4 + $0x8] sm:$0xf]
    %v85 = vld [vmem:[#allocation4 + $0xc] sm:$0xf]
    %v86 = vld [vmem:[#allocation4 + $0x10] sm:$0xf]
    %v87 = vld [vmem:[#allocation4 + $0x14] sm:$0xf]
    %v88 = vld [vmem:[#allocation4 + $0x18] sm:$0xf]
    %v89 = vld [vmem:[#allocation4 + $0x1c] sm:$0xf]
    %v90 = vld [vmem:[#allocation4 + $0x20] sm:$0xf]
    %v91 = vld [vmem:[#allocation4 + $0x24] sm:$0xf]
    %v92 = vld [vmem:[#allocation4 + $0x28] sm:$0xf]
    %v93 = vld [vmem:[#allocation4 + $0x2c] sm:$0xf]
    %v94 = vld [vmem:[#allocation4 + $0x30] sm:$0xf]
    %v95 = vld [vmem:[#allocation4 + $0x34] sm:$0xf]
    %v96 = vld [vmem:[#allocation4 + $0x38] sm:$0xf]
    %v97 = vld [vmem:[#allocation4 + $0x3c] sm:$0xf]
    %v98 = vld [vmem:[#allocation4 + $0x40] sm:$0xf]
    %v99 = vld [vmem:[#allocation4 + $0x44] sm:$0xf]
    %v100 = vld [vmem:[#allocation4 + $0x48] sm:$0xf]
    %v101 = vld [vmem:[#allocation4 + $0x4c] sm:$0xf]
    %v102 = vld [vmem:[#allocation4 + $0x50] sm:$0xf]
    %v103 = vld [vmem:[#allocation4 + $0x54] sm:$0xf]
    %v104 = vld [vmem:[#allocation4 + $0x58] sm:$0xf]
    %v105 = vld [vmem:[#allocation4 + $0x5c] sm:$0xf]
    %v106 = vld [vmem:[#allocation4 + $0x60] sm:$0xf]
    %v107 = vld [vmem:[#allocation4 + $0x64] sm:$0xf]
    %v108 = vld [vmem:[#allocation4 + $0x68] sm:$0xf]
    %v109 = vld [vmem:[#allocation4 + $0x6c] sm:$0xf]
    %v110 = vld [vmem:[#allocation4 + $0x70] sm:$0xf]
    %v111 = vld [vmem:[#allocation4 + $0x74] sm:$0xf]
    %v112 = vld [vmem:[#allocation4 + $0x78] sm:$0xf]
    %v113 = vld [vmem:[#allocation4 + $0x7c] sm:$0xf]
    %v114 = vld [vmem:[#allocation4 + $0x80] sm:$0xf]
    %v115 = vld [vmem:[#allocation4 + $0x84] sm:$0xf]
    %v116 = vld [vmem:[#allocation4 + $0x88] sm:$0xf]
    %v117 = vld [vmem:[#allocation4 + $0x8c] sm:$0xf]
    %v118 = vld [vmem:[#allocation4 + $0x90] sm:$0xf]
    %v119 = vld [vmem:[#allocation4 + $0x94] sm:$0xf]
    %v120 = vld [vmem:[#allocation4 + $0x98] sm:$0xf]
    %v121 = vld [vmem:[#allocation4 + $0x9c] sm:$0xf]
    %v122 = vld [vmem:[#allocation4 + $0xa0] sm:$0xf]
    %v123 = vld [vmem:[#allocation4 + $0xa4] sm:$0xf]
    %v124 = vld [vmem:[#allocation4 + $0xa8] sm:$0xf]
    %v125 = vld [vmem:[#allocation4 + $0xac] sm:$0xf]
    %v126 = vld [vmem:[#allocation4 + $0xb0] sm:$0xf]
    %v127 = vld [vmem:[#allocation4 + $0xb4] sm:$0xf]
    %v128 = vld [vmem:[#allocation4 + $0xb8] sm:$0xf]
    %v129 = vld [vmem:[#allocation4 + $0xbc] sm:$0xf]
    %v130 = vld [vmem:[#allocation4 + $0xc0] sm:$0xf]
    %v131 = vld [vmem:[#allocation4 + $0xc4] sm:$0xf]
    %v132 = vld [vmem:[#allocation4 + $0xc8] sm:$0xf]
    %v133 = vld [vmem:[#allocation4 + $0xcc] sm:$0xf]
    %v134 = vld [vmem:[#allocation4 + $0xd0] sm:$0xf]
    %v135 = vld [vmem:[#allocation4 + $0xd4] sm:$0xf]
    %v136 = vld [vmem:[#allocation4 + $0xd8] sm:$0xf]
    %v137 = vld [vmem:[#allocation4 + $0xdc] sm:$0xf]
    %v138 = vld [vmem:[#allocation4 + $0xe0] sm:$0xf]
    %v139 = vld [vmem:[#allocation4 + $0xe4] sm:$0xf]
    %v140 = vld [vmem:[#allocation4 + $0xe8] sm:$0xf]
    %v141 = vld [vmem:[#allocation4 + $0xec] sm:$0xf]
    %v142 = vld [vmem:[#allocation4 + $0xf0] sm:$0xf]
    %v143 = vld [vmem:[#allocation4 + $0xf4] sm:$0xf]
    %v144 = vld [vmem:[#allocation4 + $0xf8] sm:$0xf]
    %v145 = vld [vmem:[#allocation4 + $0xfc] sm:$0xf]
    %v146 = vld [vmem:[#allocation4 + $0x100] sm:$0xf]
    %v147 = vld [vmem:[#allocation4 + $0x104] sm:$0xf]
    %v148 = vld [vmem:[#allocation4 + $0x108] sm:$0xf]
    %v149 = vld [vmem:[#allocation4 + $0x10c] sm:$0xf]
    %v150 = vld [vmem:[#allocation4 + $0x110] sm:$0xf]
    %v151 = vld [vmem:[#allocation4 + $0x114] sm:$0xf]
    %v152 = vld [vmem:[#allocation4 + $0x118] sm:$0xf]
    %v153 = vld [vmem:[#allocation4 + $0x11c] sm:$0xf]
    %v154 = vld [vmem:[#allocation4 + $0x120] sm:$0xf]
    %v155 = vld [vmem:[#allocation4 + $0x124] sm:$0xf]
    %v156 = vld [vmem:[#allocation4 + $0x128] sm:$0xf]
    %v157 = vld [vmem:[#allocation4 + $0x12c] sm:$0xf]
    %v158 = vld [vmem:[#allocation4 + $0x130] sm:$0xf]
    %v159 = vld [vmem:[#allocation4 + $0x134] sm:$0xf]
    %v160 = vld [vmem:[#allocation4 + $0x138] sm:$0xf]
    %v161 = vld [vmem:[#allocation4 + $0x13c] sm:$0xf]
    %v162 = vld [vmem:[#allocation4 + $0x140] sm:$0xf]
    %v163 = vld [vmem:[#allocation4 + $0x144] sm:$0xf]
    %v164 = vld [vmem:[#allocation4 + $0x148] sm:$0xf]
    %v165 = vld [vmem:[#allocation4 + $0x14c] sm:$0xf]
    %v166 = vld [vmem:[#allocation4 + $0x150] sm:$0xf]
    %v167 = vld [vmem:[#allocation4 + $0x154] sm:$0xf]
    %v168 = vld [vmem:[#allocation4 + $0x158] sm:$0xf]
    %v169 = vld [vmem:[#allocation4 + $0x15c] sm:$0xf]
    %v170 = vld [vmem:[#allocation4 + $0x160] sm:$0xf]
    %v171 = vld [vmem:[#allocation4 + $0x164] sm:$0xf]
    %v172 = vld [vmem:[#allocation4 + $0x168] sm:$0xf]
    %v173 = vld [vmem:[#allocation4 + $0x16c] sm:$0xf]
    %v174 = vld [vmem:[#allocation4 + $0x170] sm:$0xf]
    %v175 = vld [vmem:[#allocation4 + $0x174] sm:$0xf]
    %v176 = vld [vmem:[#allocation4 + $0x178] sm:$0xf]
    %v177 = vld [vmem:[#allocation4 + $0x17c] sm:$0xf]
    %v178 = vld [vmem:[%s2] sm:$0x1]
    %v180 = vlaneseq
    %v181 = vshrl.u32 %v180, 7
    %v182 = vsub.s32 0, %v181
    %v183 = vrot.slane %v178, %v182
    %v281 = vunpack.c.l.b16 %v82
    %v282 = vunpack.c.l.b16 %v83
    %v283 = vunpack.c.l.b16 %v84
    %v284 = vunpack.c.l.b16 %v85
    %v285 = vunpack.c.l.b16 %v86
    %v286 = vunpack.c.l.b16 %v87
    %v287 = vunpack.c.l.b16 %v88
    %v288 = vunpack.c.l.b16 %v89
    %v289 = vunpack.c.l.b16 %v90
    %v290 = vunpack.c.l.b16 %v91
    %v291 = vunpack.c.l.b16 %v92
    %v292 = vunpack.c.l.b16 %v93
    %v293 = vunpack.c.l.b16 %v94
    %v294 = vunpack.c.l.b16 %v95
    %v295 = vunpack.c.l.b16 %v96
    %v296 = vunpack.c.l.b16 %v97
    %v297 = vunpack.c.l.b16 %v98
    %v298 = vunpack.c.l.b16 %v99
    %v299 = vunpack.c.l.b16 %v100
    %v300 = vunpack.c.l.b16 %v101
    %v301 = vunpack.c.l.b16 %v102
    %v302 = vunpack.c.l.b16 %v103
    %v303 = vunpack.c.l.b16 %v104
    %v304 = vunpack.c.l.b16 %v105
    %v305 = vunpack.c.l.b16 %v106
    %v306 = vunpack.c.l.b16 %v107
    %v307 = vunpack.c.l.b16 %v108
    %v308 = vunpack.c.l.b16 %v109
    %v309 = vunpack.c.l.b16 %v110
    %v310 = vunpack.c.l.b16 %v111
    %v311 = vunpack.c.l.b16 %v112
    %v312 = vunpack.c.l.b16 %v113
    %v313 = vunpack.c.l.b16 %v114
    %v314 = vunpack.c.l.b16 %v115
    %v315 = vunpack.c.l.b16 %v116
    %v316 = vunpack.c.l.b16 %v117
    %v317 = vunpack.c.l.b16 %v118
    %v318 = vunpack.c.l.b16 %v119
    %v319 = vunpack.c.l.b16 %v120
    %v320 = vunpack.c.l.b16 %v121
    %v321 = vunpack.c.l.b16 %v122
    %v322 = vunpack.c.l.b16 %v123
    %v323 = vunpack.c.l.b16 %v124
    %v324 = vunpack.c.l.b16 %v125
    %v325 = vunpack.c.l.b16 %v126
    %v326 = vunpack.c.l.b16 %v127
    %v327 = vunpack.c.l.b16 %v128
    %v328 = vunpack.c.l.b16 %v129
    %v329 = vunpack.c.l.b16 %v130
    %v330 = vunpack.c.l.b16 %v131
    %v331 = vunpack.c.l.b16 %v132
    %v332 = vunpack.c.l.b16 %v133
    %v333 = vunpack.c.l.b16 %v134
    %v334 = vunpack.c.l.b16 %v135
    %v335 = vunpack.c.l.b16 %v136
    %v336 = vunpack.c.l.b16 %v137
    %v337 = vunpack.c.l.b16 %v138
    %v338 = vunpack.c.l.b16 %v139
    %v339 = vunpack.c.l.b16 %v140
    %v340 = vunpack.c.l.b16 %v141
    %v341 = vunpack.c.l.b16 %v142
    %v342 = vunpack.c.l.b16 %v143
    %v343 = vunpack.c.l.b16 %v144
    %v344 = vunpack.c.l.b16 %v145
    %v345 = vunpack.c.l.b16 %v146
    %v346 = vunpack.c.l.b16 %v147
    %v347 = vunpack.c.l.b16 %v148
    %v348 = vunpack.c.l.b16 %v149
    %v349 = vunpack.c.l.b16 %v150
    %v350 = vunpack.c.l.b16 %v151
    %v351 = vunpack.c.l.b16 %v152
    %v352 = vunpack.c.l.b16 %v153
    %v353 = vunpack.c.l.b16 %v154
    %v354 = vunpack.c.l.b16 %v155
    %v355 = vunpack.c.l.b16 %v156
    %v356 = vunpack.c.l.b16 %v157
    %v357 = vunpack.c.l.b16 %v158
    %v358 = vunpack.c.l.b16 %v159
    %v359 = vunpack.c.l.b16 %v160
    %v360 = vunpack.c.l.b16 %v161
    %v361 = vunpack.c.l.b16 %v162
    %v362 = vunpack.c.l.b16 %v163
    %v363 = vunpack.c.l.b16 %v164
    %v364 = vunpack.c.l.b16 %v165
    %v365 = vunpack.c.l.b16 %v166
    %v366 = vunpack.c.l.b16 %v167
    %v367 = vunpack.c.l.b16 %v168
    %v368 = vunpack.c.l.b16 %v169
    %v369 = vunpack.c.l.b16 %v170
    %v370 = vunpack.c.l.b16 %v171
    %v371 = vunpack.c.l.b16 %v172
    %v372 = vunpack.c.l.b16 %v173
    %v373 = vunpack.c.l.b16 %v174
    %v374 = vunpack.c.l.b16 %v175
    %v375 = vunpack.c.l.b16 %v176
    %v376 = vunpack.c.l.b16 %v177
    %v377 = vpack.c.b16 %v282, %v281
    %v378 = vpack.c.b16 %v284, %v283
    %v379 = vpack.c.b16 %v286, %v285
    %v380 = vpack.c.b16 %v288, %v287
    %v381 = vpack.c.b16 %v290, %v289
    %v382 = vpack.c.b16 %v292, %v291
    %v383 = vpack.c.b16 %v294, %v293
    %v384 = vpack.c.b16 %v296, %v295
    %v385 = vpack.c.b16 %v298, %v297
    %v386 = vpack.c.b16 %v300, %v299
    %v387 = vpack.c.b16 %v302, %v301
    %v388 = vpack.c.b16 %v304, %v303
    %v389 = vpack.c.b16 %v306, %v305
    %v390 = vpack.c.b16 %v308, %v307
    %v391 = vpack.c.b16 %v310, %v309
    %v392 = vpack.c.b16 %v312, %v311
    %v393 = vpack.c.b16 %v314, %v313
    %v394 = vpack.c.b16 %v316, %v315
    %v395 = vpack.c.b16 %v318, %v317
    %v396 = vpack.c.b16 %v320, %v319
    %v397 = vpack.c.b16 %v322, %v321
    %v398 = vpack.c.b16 %v324, %v323
    %v399 = vpack.c.b16 %v326, %v325
    %v400 = vpack.c.b16 %v328, %v327
    %v401 = vpack.c.b16 %v330, %v329
    %v402 = vpack.c.b16 %v332, %v331
    %v403 = vpack.c.b16 %v334, %v333
    %v404 = vpack.c.b16 %v336, %v335
    %v405 = vpack.c.b16 %v338, %v337
    %v406 = vpack.c.b16 %v340, %v339
    %v407 = vpack.c.b16 %v342, %v341
    %v408 = vpack.c.b16 %v344, %v343
    %v409 = vpack.c.b16 %v346, %v345
    %v410 = vpack.c.b16 %v348, %v347
    %v411 = vpack.c.b16 %v350, %v349
    %v412 = vpack.c.b16 %v352, %v351
    %v413 = vpack.c.b16 %v354, %v353
    %v414 = vpack.c.b16 %v356, %v355
    %v415 = vpack.c.b16 %v358, %v357
    %v416 = vpack.c.b16 %v360, %v359
    %v417 = vpack.c.b16 %v362, %v361
    %v418 = vpack.c.b16 %v364, %v363
    %v419 = vpack.c.b16 %v366, %v365
    %v420 = vpack.c.b16 %v368, %v367
    %v421 = vpack.c.b16 %v370, %v369
    %v422 = vpack.c.b16 %v372, %v371
    %v423 = vpack.c.b16 %v374, %v373
    %v424 = vpack.c.b16 %v376, %v375
    %473 = vmatprep.subr.bf16.mxu0 0
    %474 = vmatpush1.bf16.msra.mxu0 %v384
    %475 = vmatprep.subr.bf16.mxu0 0
    %476 = vmatpush1.bf16.msra.mxu0 %v383
    %477 = vmatprep.subr.bf16.mxu0 0
    %478 = vmatpush1.bf16.msra.mxu0 %v382
    %479 = vmatprep.subr.bf16.mxu0 0
    %480 = vmatpush1.bf16.msra.mxu0 %v381
    %481 = vmatprep.subr.bf16.mxu0 0
    %482 = vmatpush1.bf16.msra.mxu0 %v380
    %483 = vmatprep.subr.bf16.mxu0 0
    %484 = vmatpush1.bf16.msra.mxu0 %v379
    %485 = vmatprep.subr.bf16.mxu0 0
    %486 = vmatpush1.bf16.msra.mxu0 %v378
    %487 = vmatprep.subr.bf16.mxu0 0
    %488 = vmatpush1.bf16.msra.mxu0 %v377
    %489 = vmatprep.subr.bf16.mxu0 0
    %490 = vmatpush2.bf16.msra.mxu0 %v392
    %491 = vmatprep.subr.bf16.mxu0 0
    %492 = vmatpush2.bf16.msra.mxu0 %v391
    %493 = vmatprep.subr.bf16.mxu0 0
    %494 = vmatpush2.bf16.msra.mxu0 %v390
    %495 = vmatprep.subr.bf16.mxu0 0
    %496 = vmatpush2.bf16.msra.mxu0 %v389
    %497 = vmatprep.subr.bf16.mxu0 0
    %498 = vmatpush2.bf16.msra.mxu0 %v388
    %499 = vmatprep.subr.bf16.mxu0 0
    %500 = vmatpush2.bf16.msra.mxu0 %v387
    %501 = vmatprep.subr.bf16.mxu0 0
    %502 = vmatpush2.bf16.msra.mxu0 %v386
    %503 = vmatprep.subr.bf16.mxu0 0
    %504 = vmatpush2.bf16.msra.mxu0 %v385
    %505 = vmatprep.mubr.bf16.mxu0 %v77
    %506 = vmatmul.mubr.bf16.gmra.mxu0 %v76
    %v507 = vpop.f32.mrf.mxu0
    %v508 = vadd.f32 %v183, %v507
    %v509 = vpop.f32.mrf.mxu0
    %v510 = vpop.f32.mrf.mxu0
    %v511 = vpop.f32.mrf.mxu0
    %512 = vdwg.mxu0
    %513 = vmatprep.subr.bf16.mxu0 0
    %514 = vmatpush1.bf16.msra.mxu0 %v400
    %515 = vmatprep.subr.bf16.mxu0 0
    %516 = vmatpush1.bf16.msra.mxu0 %v399
    %517 = vmatprep.subr.bf16.mxu0 0
    %518 = vmatpush1.bf16.msra.mxu0 %v398
    %519 = vmatprep.subr.bf16.mxu0 0
    %520 = vmatpush1.bf16.msra.mxu0 %v397
    %521 = vmatprep.subr.bf16.mxu0 0
    %522 = vmatpush1.bf16.msra.mxu0 %v396
    %523 = vmatprep.subr.bf16.mxu0 0
    %524 = vmatpush1.bf16.msra.mxu0 %v395
    %525 = vmatprep.subr.bf16.mxu0 0
    %526 = vmatpush1.bf16.msra.mxu0 %v394
    %527 = vmatprep.subr.bf16.mxu0 0
    %528 = vmatpush1.bf16.msra.mxu0 %v393
    %529 = vmatprep.subr.bf16.mxu0 0
    %530 = vmatpush2.bf16.msra.mxu0 %v408
    %531 = vmatprep.subr.bf16.mxu0 0
    %532 = vmatpush2.bf16.msra.mxu0 %v407
    %533 = vmatprep.subr.bf16.mxu0 0
    %534 = vmatpush2.bf16.msra.mxu0 %v406
    %535 = vmatprep.subr.bf16.mxu0 0
    %536 = vmatpush2.bf16.msra.mxu0 %v405
    %537 = vmatprep.subr.bf16.mxu0 0
    %538 = vmatpush2.bf16.msra.mxu0 %v404
    %539 = vmatprep.subr.bf16.mxu0 0
    %540 = vmatpush2.bf16.msra.mxu0 %v403
    %541 = vmatprep.subr.bf16.mxu0 0
    %542 = vmatpush2.bf16.msra.mxu0 %v402
    %543 = vmatprep.subr.bf16.mxu0 0
    %544 = vmatpush2.bf16.msra.mxu0 %v401
    %545 = vmatprep.mubr.bf16.mxu0 %v79
    %546 = vmatmul.mubr.bf16.gmra.mxu0 %v78
    %v547 = vpop.f32.mrf.mxu0
    %v548 = vadd.f32 %v508, %v547
    %v549 = vpop.f32.mrf.mxu0
    %v550 = vpop.f32.mrf.mxu0
    %v551 = vpop.f32.mrf.mxu0
    %552 = vdwg.mxu0
    %553 = vmatprep.subr.bf16.mxu0 0
    %554 = vmatpush1.bf16.msra.mxu0 %v416
    %555 = vmatprep.subr.bf16.mxu0 0
    %556 = vmatpush1.bf16.msra.mxu0 %v415
    %557 = vmatprep.subr.bf16.mxu0 0
    %558 = vmatpush1.bf16.msra.mxu0 %v414
    %559 = vmatprep.subr.bf16.mxu0 0
    %560 = vmatpush1.bf16.msra.mxu0 %v413
    %561 = vmatprep.subr.bf16.mxu0 0
    %562 = vmatpush1.bf16.msra.mxu0 %v412
    %563 = vmatprep.subr.bf16.mxu0 0
    %564 = vmatpush1.bf16.msra.mxu0 %v411
    %565 = vmatprep.subr.bf16.mxu0 0
    %566 = vmatpush1.bf16.msra.mxu0 %v410
    %567 = vmatprep.subr.bf16.mxu0 0
    %568 = vmatpush1.bf16.msra.mxu0 %v409
    %569 = vmatprep.subr.bf16.mxu0 0
    %570 = vmatpush2.bf16.msra.mxu0 %v424
    %571 = vmatprep.subr.bf16.mxu0 0
    %572 = vmatpush2.bf16.msra.mxu0 %v423
    %573 = vmatprep.subr.bf16.mxu0 0
    %574 = vmatpush2.bf16.msra.mxu0 %v422
    %575 = vmatprep.subr.bf16.mxu0 0
    %576 = vmatpush2.bf16.msra.mxu0 %v421
    %577 = vmatprep.subr.bf16.mxu0 0
    %578 = vmatpush2.bf16.msra.mxu0 %v420
    %579 = vmatprep.subr.bf16.mxu0 0
    %580 = vmatpush2.bf16.msra.mxu0 %v419
    %581 = vmatprep.subr.bf16.mxu0 0
    %582 = vmatpush2.bf16.msra.mxu0 %v418
    %583 = vmatprep.subr.bf16.mxu0 0
    %584 = vmatpush2.bf16.msra.mxu0 %v417
    %585 = vmatprep.mubr.bf16.mxu0 %v81
    %586 = vmatmul.mubr.bf16.gmra.mxu0 %v80
    %v587 = vpop.f32.mrf.mxu0
    %v588 = vadd.f32 %v548, %v587
    %v589 = vpop.f32.mrf.mxu0
    %v590 = vpop.f32.mrf.mxu0
    %v591 = vpop.f32.mrf.mxu0
    %592 = vdwg.mxu0
    %v593 = vlaneseq
    %v594 = vand.u32 %v593, 127
    %vm595 = vcmp.lt.s32.totalorder %v594, 4
    %vm596 = vcmp.ge.s32.totalorder %v594, 4
    %vm597 = vcmp.lt.s32.totalorder %v594, 11
    %vm598 = vmand %vm596, %vm597
    %vm599 = vcmp.ge.s32.totalorder %v594, 11
    %vm600 = vcmp.lt.s32.totalorder %v594, 18
    %vm601 = vmand %vm599, %vm600
    %v602 = vsel %vm600, %v588, -1e+30
    %vm603 = vcmask 1041408
    %v604 = vsel %vm603, %v602, -inf
    %605 = vmax.xlane.f32.xlu0 %v604
    %v606 = vpop.xlane.xlu0 %605
    %v607 = vsub.f32 %v588, %v606
    %v608 = vsel %vm600, %v607, -1e+30
    %v609 = vmul.f32 %v608, 1.442695
    %v610 = vpow.pop %v609
    %v611 = vsel %vm595, %v610, 0.0
    %v612 = vsel %vm603, %v611, 0.0
    %613 = vadd.xlane.f32.xlu0 %v612
    %v614 = vpop.xlane.xlu0 %613
    %v615 = vsel %vm598, %v610, 0.0
    %v616 = vsel %vm603, %v615, 0.0
    %617 = vadd.xlane.f32.xlu0 %v616
    %v618 = vpop.xlane.xlu0 %617
    %v619 = vsel %vm601, %v610, 0.0
    %v620 = vsel %vm603, %v619, 0.0
    %621 = vadd.xlane.f32.xlu0 %v620
    %v622 = vpop.xlane.xlu0 %621
    %v623 = vrcp.pop %v614
    %v624 = vrcp.pop %v618
    %v625 = vrcp.pop %v622
    %v626 = vsel %vm598, %v624, %v625
    %v627 = vsel %vm595, %v623, %v626
    %v628 = vmul.f32 %v610, %v627
    %v629 = vpack.c.bf16 %v628, %v628
    %630 = vst [vmem:[%s3] sm:$0x1] %v629
    // Predicated region
    $region22: #{bert_train_heads.1} parent=1 // pred_check
      _
    $region23: #{bert_train_heads.1} parent=1 // pred_check_branch
      %632 = sbr.rel (0) target = $region25
    $region24: #{bert_train_heads.1} parent=1 // pred_region
      _
    $region25: #{bert_train_heads.1} parent=1 // pred_fallthru
      _
    // Predicated region
    $region26: #{bert_train_heads.1} parent=1 // pred_check
      _
    $region27: #{bert_train_heads.1} parent=1 // pred_check_branch
      %634 = sbr.rel (0) target = $region29
    $region28: #{bert_train_heads.1} parent=1 // pred_region
      _
    $region29: #{bert_train_heads.1} parent=1 // pred_fallthru
      _
    %635 = vsyncpa [#allocation3], 1
    %636 = vsyncpa [#allocation5], 1

</llo_original>
